<compile_context>
chip_gen: v7x
topology: tpu7x:2x2x1
jax: 0.10.0
libtpu: 0.0.40
codegen_flags: <defaults>
</compile_context>

<pallas_src>
import functools

import jax
import jax.numpy as jnp
from jax import lax
from jax.experimental import pallas as pl
from jax.experimental.pallas import tpu as pltpu

# ---- small, lane-dense config (consistent with config.hidden_size / mlp_dim) ----
HIDDEN_SIZE = 128   # config.hidden_size   (multiple of 128 -> lane-dense)
MLP_DIM     = 512   # config.transformer['mlp_dim']
BATCH       = 2
SEQ         = 8

_INV_SQRT2 = 0.7071067811865476


# ============================ fused Pallas kernel ============================

def _mlp_fused_kernel(x_ref, w1_ref, b1_ref, w2_ref, b2_ref, o_ref):
    """One token-row tile: y = gelu(x @ W1 + b1) @ W2 + b2 (dropout = identity).

    x_ref : (tm, H)  f32        w1_ref: (H, D)  bf16     b1_ref: (1, D) f32
    w2_ref: (D, H)  bf16        b2_ref: (1, H)  f32      o_ref : (tm, H) f32
    All intermediates stay in VMEM / vregs.
    """
    x = x_ref[...].astype(jnp.bfloat16)

    # fc1 (MXU, f32 accumulate) + bias
    h = jnp.dot(x, w1_ref[...], preferred_element_type=jnp.float32) + b1_ref[...]

    # exact erf GELU (matches torch.nn.functional.gelu default)
    g = 0.5 * h * (1.0 + lax.erf(h * _INV_SQRT2))

    # dropout -> identity (eval), fc2 (MXU, f32 accumulate) + bias, dropout -> identity
    y = jnp.dot(g.astype(jnp.bfloat16), w2_ref[...],
                preferred_element_type=jnp.float32) + b2_ref[...]

    o_ref[...] = y.astype(o_ref.dtype)


# ============================ wrapper ============================

def mlp_forward(x, params, *, tm=None):
    """x: (B, S, hidden) f32 -> (B, S, hidden) f32, matching Mlp.forward."""
    B, S, H = x.shape
    w1 = params["w1"].astype(jnp.bfloat16)      # (H, D)
    w2 = params["w2"].astype(jnp.bfloat16)      # (D, H)
    b1 = params["b1"].reshape(1, -1).astype(jnp.float32)   # (1, D)
    b2 = params["b2"].reshape(1, -1).astype(jnp.float32)   # (1, H)
    D = w1.shape[1]

    M = B * S
    if tm is None:
        tm = min(128, max(8, ((M + 7) // 8) * 8))
    n_tiles = pl.cdiv(M, tm)
    Mp = n_tiles * tm

    xt = x.reshape(M, H).astype(jnp.float32)
    if Mp != M:
        xt = jnp.pad(xt, ((0, Mp - M), (0, 0)))

    out = pl.pallas_call(
        _mlp_fused_kernel,
        grid=(n_tiles,),
        in_specs=[
            pl.BlockSpec((tm, H), lambda i: (i, 0)),   # x row-tile
            pl.BlockSpec((H, D), lambda i: (0, 0)),    # W1 (resident)
            pl.BlockSpec((1, D), lambda i: (0, 0)),    # b1
            pl.BlockSpec((D, H), lambda i: (0, 0)),    # W2 (resident)
            pl.BlockSpec((1, H), lambda i: (0, 0)),    # b2
        ],
        out_specs=pl.BlockSpec((tm, H), lambda i: (i, 0)),
        out_shape=jax.ShapeDtypeStruct((Mp, H), jnp.float32),
        compiler_params=pltpu.CompilerParams(
            dimension_semantics=("parallel",),         # shard row tiles across TCs (v7x)
            vmem_limit_bytes=64 << 20,
        ),
    )(xt, w1, b1, w2, b2)

    return out[:M].reshape(B, S, H)


# ============================ params (torch-equivalent init) ============================

def init_params(key, hidden=HIDDEN_SIZE, mlp_dim=MLP_DIM):
    k1, k2, k3, k4 = jax.random.split(key, 4)

    def xavier_uniform(k, fan_in, fan_out):
        limit = (6.0 / (fan_in + fan_out)) ** 0.5
        return jax.random.uniform(k, (fan_in, fan_out), jnp.float32, -limit, limit)

    return {
        "w1": xavier_uniform(k1, hidden, mlp_dim),            # fc1.weight (stored (in, out))
        "b1": 1e-6 * jax.random.normal(k2, (mlp_dim,), jnp.float32),
        "w2": xavier_uniform(k3, mlp_dim, hidden),             # fc2.weight (stored (in, out))
        "b2": 1e-6 * jax.random.normal(k4, (hidden,), jnp.float32),
    }


if __name__ == "__main__":
    key = jax.random.PRNGKey(0)
    pkey, xkey = jax.random.split(key)
    params = init_params(pkey)

    # input matching Mlp.forward: (batch, seq, hidden_size)
    x = jax.random.normal(xkey, (BATCH, SEQ, HIDDEN_SIZE), jnp.float32)

    # tm=8 -> grid=(2,) so the (tiny) demo still exercises the parallel grid axis.
    fwd = jax.jit(functools.partial(mlp_forward, params=params, tm=8))
    out = fwd(x)
    out = jax.block_until_ready(out)

    assert out.shape == (BATCH, SEQ, HIDDEN_SIZE), out.shape
    assert bool(jnp.all(jnp.isfinite(out)))
    print("KERNEL_OK")
</pallas_src>

<mosaic_0001>
module attributes {stable_mosaic.version = 11 : i64} {
  func.func @_mlp_fused_kernel(%arg0: i32, %arg1: memref<8x128xf32, #tpu.memory_space<vmem>>, %arg2: memref<128x512xbf16, #tpu.memory_space<vmem>>, %arg3: memref<1x512xf32, #tpu.memory_space<vmem>>, %arg4: memref<512x128xbf16, #tpu.memory_space<vmem>>, %arg5: memref<1x128xf32, #tpu.memory_space<vmem>>, %arg6: memref<8x128xf32, #tpu.memory_space<vmem>>) attributes {dimension_semantics = [#tpu.dimension_semantics<parallel>], iteration_bounds = array<i64: 2>, scalar_prefetch = 0 : i64, scratch_operands = 0 : i64, tpu.core_type = #tpu.core_type<tc>, window_params = [{transform_indices = @transform_0, window_bounds = array<i64: 8, 128>}, {pipeline_mode = #tpu.pipeline_mode<synchronous>, transform_indices = @transform_1, window_bounds = array<i64: 128, 512>}, {pipeline_mode = #tpu.pipeline_mode<synchronous>, transform_indices = @transform_2, window_bounds = array<i64: 1, 512>}, {pipeline_mode = #tpu.pipeline_mode<synchronous>, transform_indices = @transform_3, window_bounds = array<i64: 512, 128>}, {pipeline_mode = #tpu.pipeline_mode<synchronous>, transform_indices = @transform_4, window_bounds = array<i64: 1, 128>}, {transform_indices = @transform_5, window_bounds = array<i64: 8, 128>}]} {
    %c0 = arith.constant 0 : index
    %c0_0 = arith.constant 0 : index
    %0 = vector.load %arg1[%c0, %c0_0] : memref<8x128xf32, #tpu.memory_space<vmem>>, vector<8x128xf32>
    %1 = arith.truncf %0 : vector<8x128xf32> to vector<8x128xbf16>
    %c0_1 = arith.constant 0 : index
    %c0_2 = arith.constant 0 : index
    %2 = vector.load %arg2[%c0_1, %c0_2] : memref<128x512xbf16, #tpu.memory_space<vmem>>, vector<128x512xbf16>
    %cst = arith.constant dense<0.000000e+00> : vector<8x512xf32>
    %3 = tpu.matmul %1, %2, %cst {dimension_numbers = #tpu.dot_dimension_numbers<[1], [0], [0], [1], [0, 0, 1, 1], [], []>} : vector<8x128xbf16>, vector<128x512xbf16>, vector<8x512xf32> -> vector<8x512xf32>
    %c0_3 = arith.constant 0 : index
    %c0_4 = arith.constant 0 : index
    %4 = vector.load %arg3[%c0_3, %c0_4] : memref<1x512xf32, #tpu.memory_space<vmem>>, vector<1x512xf32>
    %5 = vector.broadcast %4 : vector<1x512xf32> to vector<8x512xf32>
    %6 = arith.addf %3, %5 : vector<8x512xf32>
    %cst_5 = arith.constant 5.000000e-01 : f32
    %7 = vector.broadcast %cst_5 : f32 to vector<8x512xf32>
    %8 = arith.mulf %7, %6 : vector<8x512xf32>
    %cst_6 = arith.constant 0.707106769 : f32
    %9 = vector.broadcast %cst_6 : f32 to vector<8x512xf32>
    %10 = arith.mulf %6, %9 : vector<8x512xf32>
    %11 = math.erf %10 : vector<8x512xf32>
    %cst_7 = arith.constant 1.000000e+00 : f32
    %12 = vector.broadcast %cst_7 : f32 to vector<8x512xf32>
    %13 = arith.addf %12, %11 : vector<8x512xf32>
    %14 = arith.mulf %8, %13 : vector<8x512xf32>
    %15 = arith.truncf %14 : vector<8x512xf32> to vector<8x512xbf16>
    %c0_8 = arith.constant 0 : index
    %c0_9 = arith.constant 0 : index
    %16 = vector.load %arg4[%c0_8, %c0_9] : memref<512x128xbf16, #tpu.memory_space<vmem>>, vector<512x128xbf16>
    %cst_10 = arith.constant dense<0.000000e+00> : vector<8x128xf32>
    %17 = tpu.matmul %15, %16, %cst_10 {dimension_numbers = #tpu.dot_dimension_numbers<[1], [0], [0], [1], [0, 0, 1, 1], [], []>} : vector<8x512xbf16>, vector<512x128xbf16>, vector<8x128xf32> -> vector<8x128xf32>
    %c0_11 = arith.constant 0 : index
    %c0_12 = arith.constant 0 : index
    %18 = vector.load %arg5[%c0_11, %c0_12] : memref<1x128xf32, #tpu.memory_space<vmem>>, vector<1x128xf32>
    %19 = vector.broadcast %18 : vector<1x128xf32> to vector<8x128xf32>
    %20 = arith.addf %17, %19 : vector<8x128xf32>
    %c0_13 = arith.constant 0 : index
    %c0_14 = arith.constant 0 : index
    %21 = vector.load %arg6[%c0_13, %c0_14] : memref<8x128xf32, #tpu.memory_space<vmem>>, vector<8x128xf32>
    tpu.vector_store %arg6[%c0_13, %c0_14], %20 {strides = array<i32>} : memref<8x128xf32, #tpu.memory_space<vmem>>, vector<8x128xf32>,
    return
  }
  func.func @transform_0(%arg0: i32) -> (i32, i32) {
    %c0_i32 = arith.constant 0 : i32
    %c0_i32_0 = arith.constant 0 : i32
    return %arg0, %c0_i32 : i32, i32
  }
  func.func @transform_1(%arg0: i32) -> (i32, i32) {
    %c0_i32 = arith.constant 0 : i32
    %c0_i32_0 = arith.constant 0 : i32
    %c0_i32_1 = arith.constant 0 : i32
    return %c0_i32, %c0_i32_0 : i32, i32
  }
  func.func @transform_2(%arg0: i32) -> (i32, i32) {
    %c0_i32 = arith.constant 0 : i32
    %c0_i32_0 = arith.constant 0 : i32
    %c0_i32_1 = arith.constant 0 : i32
    return %c0_i32, %c0_i32_0 : i32, i32
  }
  func.func @transform_3(%arg0: i32) -> (i32, i32) {
    %c0_i32 = arith.constant 0 : i32
    %c0_i32_0 = arith.constant 0 : i32
    %c0_i32_1 = arith.constant 0 : i32
    return %c0_i32, %c0_i32_0 : i32, i32
  }
  func.func @transform_4(%arg0: i32) -> (i32, i32) {
    %c0_i32 = arith.constant 0 : i32
    %c0_i32_0 = arith.constant 0 : i32
    %c0_i32_1 = arith.constant 0 : i32
    return %c0_i32, %c0_i32_0 : i32, i32
  }
  func.func @transform_5(%arg0: i32) -> (i32, i32) {
    %c0_i32 = arith.constant 0 : i32
    %c0_i32_0 = arith.constant 0 : i32
    return %arg0, %c0_i32 : i32, i32
  }
}

</mosaic_0001>

<llo_original>
// kernel: mlp_forward.1
$region0: #{mlp_forward.1}
  #allocation0 [shape = 'u32[]', space=smem, size = 0x4, offset = 0x4, fixed_abs, tag = 'smem constant byte address 0x4 - core index']
  #allocation1 [shape = 'u32[144,128]{1,0:T(1,128)}', space=vmem, size = 0x12000, scoped, tag = 'internal scratch']
  %s0 = inlined_call_operand.hbm [shape: f32[16,128], index: 0, kind: input, shape index: {}]
  %s1 = inlined_call_operand.hbm [shape: bf16[128,512], index: 1, kind: input, shape index: {}]
  %s2 = inlined_call_operand.hbm [shape: f32[1,512], index: 2, kind: input, shape index: {}]
  %s3 = inlined_call_operand.hbm [shape: bf16[512,128], index: 3, kind: input, shape index: {}]
  %s4 = inlined_call_operand.hbm [shape: f32[1,128], index: 4, kind: input, shape index: {}]
  %s5 = inlined_call_operand.hbm [shape: f32[16,128], index: 5, kind: output, shape index: {}]
  %s6 = sld [smem:[#allocation0]]
  $region73: #{mlp_forward.1} parent=0
    _
  %s8 = ssub.s32 1, %s6
  %s9 = scalar_select 0, %s8, %s6
  $region1: #{mlp_forward.1} parent=0
    #allocation2 [shape = 'u8[8192]{0}', space=vmem, size = 0x2000, scoped, tag = 'input window, operand 0']
    #allocation3 [shape = 's32[2]{0}', space=sflag, size = 0x8, scoped, tag = 'scoped memory for mlp_forward.1']
    #allocation4 [shape = 's32[2]{0}', space=sflag, size = 0x8, scoped, tag = 'scoped memory for mlp_forward.1']
    #allocation5 [shape = 'u8[131072]{0}', space=vmem, size = 0x20000, scoped, tag = 'input window, operand 1, single buffered']
    #allocation6 [shape = 's32[1]{0}', space=sflag, size = 0x4, scoped, tag = 'scoped memory for mlp_forward.1']
    #allocation7 [shape = 'u8[2048]{0}', space=vmem, size = 0x800, scoped, tag = 'input window, operand 2, single buffered']
    #allocation8 [shape = 'u8[131072]{0}', space=vmem, size = 0x20000, scoped, tag = 'input window, operand 3, single buffered']
    #allocation9 [shape = 's32[1]{0}', space=sflag, size = 0x4, scoped, tag = 'scoped memory for mlp_forward.1']
    #allocation10 [shape = 'u8[512]{0}', space=vmem, size = 0x400, scoped, tag = 'input window, operand 4, single buffered']
    #allocation11 [shape = 'u8[8192]{0}', space=vmem, size = 0x2000, scoped, tag = 'output window, operand 0']
    %10 = vsyncpa [#allocation3], 0
    %s11 = scalar_lea.sflag [#allocation3], 1
    %12 = vsyncpa %s11, 0
    %13 = vsyncpa [#allocation6], 0
    %14 = vsyncpa [#allocation9], 0
    %15 = vsyncpa [#allocation4], 0
    %s16 = scalar_lea.sflag [#allocation4], 1
    %17 = vsyncpa %s16, 0
    loop: start=0, step=1, limit=4
    $region2: #{mlp_forward.1} parent=1 // loop_pre_header
      _
    $region3: #{mlp_forward.1} parent=1 // loop_header
      %s19 = sphi 0, %s23
      %p20 = scmp.ge.s32.totalorder %s19, 4
      %s29 = sphi 0, %s31
      %s32 = sphi 0, %s29
      %s33 = sphi 0, %s32
      %s49 = sphi 0, %s33
      %s53 = sphi 0, %s53
      %s55 = sphi 0, %s53
      %s56 = sphi 0, %s55
      %s70 = sphi 0, %s56
      %s74 = sphi 0, %s74
      %s76 = sphi 0, %s74
      %s77 = sphi 0, %s76
      %s91 = sphi 0, %s77
      %s95 = sphi 0, %s95
      %s97 = sphi 0, %s95
      %s98 = sphi 0, %s97
      %s112 = sphi 0, %s98
      %s116 = sphi 0, %s116
      %s118 = sphi 0, %s116
      %s119 = sphi 0, %s118
      %s133 = sphi 0, %s119
      %s139 = sphi 0, %s141
      %s142 = sphi 0, %s139
      %s143 = sphi 0, %s142
      %s159 = sphi 0, %s143
    $region4: #{mlp_forward.1} parent=1 // loop_header_branch
      %22 = sbr.rel (%p20) target = $region8
    $region5: #{mlp_forward.1} parent=1 // loop_body
      %s24 = ssub.s32 %s19, 1
      %s25 = ssub.s32 %s19, 2
      %s26 = sadd.s32 %s19, 1
      %s27 = ssub.s32 %s19, %s26
      %p28 = scmp.eq.s32.totalorder %s27, 0
      %s30 = sadd.s32 %s29, 1
      %s31 = scalar_select %p28, %s29, %s30
      %p34 = pneg %p28
      %p35 = scmp.eq.s32.totalorder %s19, 1
      %p36 = por %p34, %p35
      %p37 = scmp.ne.s32.totalorder %s29, %s32
      %p38 = scmp.eq.s32.totalorder %s19, 0
      %p39 = por %p37, %p38
      %p40 = scmp.ne.s32.totalorder %s29, %s32
      %p41 = scmp.eq.s32.totalorder %s24, 1
      %p42 = por %p40, %p41
      %p43 = scmp.ne.s32.totalorder %s32, %s33
      %p44 = scmp.eq.s32.totalorder %s24, 0
      %p45 = por %p43, %p44
      %p46 = scmp.ne.s32.totalorder %s32, %s33
      %p47 = scmp.eq.s32.totalorder %s25, 1
      %p48 = por %p46, %p47
      %p50 = scmp.ne.s32.totalorder %s33, %s49
      %p51 = scmp.eq.s32.totalorder %s25, 0
      %p52 = por %p50, %p51
      %s54 = sadd.s32 %s53, 1
      %p57 = scmp.eq.s32.totalorder %s19, 1
      %p58 = scmp.ne.s32.totalorder %s53, %s55
      %p59 = scmp.eq.s32.totalorder %s19, 0
      %p60 = por %p58, %p59
      %p61 = scmp.ne.s32.totalorder %s53, %s55
      %p62 = scmp.eq.s32.totalorder %s24, 1
      %p63 = por %p61, %p62
      %p64 = scmp.ne.s32.totalorder %s55, %s56
      %p65 = scmp.eq.s32.totalorder %s24, 0
      %p66 = por %p64, %p65
      %p67 = scmp.ne.s32.totalorder %s55, %s56
      %p68 = scmp.eq.s32.totalorder %s25, 1
      %p69 = por %p67, %p68
      %p71 = scmp.ne.s32.totalorder %s56, %s70
      %p72 = scmp.eq.s32.totalorder %s25, 0
      %p73 = por %p71, %p72
      %s75 = sadd.s32 %s74, 1
      %p78 = scmp.eq.s32.totalorder %s19, 1
      %p79 = scmp.ne.s32.totalorder %s74, %s76
      %p80 = scmp.eq.s32.totalorder %s19, 0
      %p81 = por %p79, %p80
      %p82 = scmp.ne.s32.totalorder %s74, %s76
      %p83 = scmp.eq.s32.totalorder %s24, 1
      %p84 = por %p82, %p83
      %p85 = scmp.ne.s32.totalorder %s76, %s77
      %p86 = scmp.eq.s32.totalorder %s24, 0
      %p87 = por %p85, %p86
      %p88 = scmp.ne.s32.totalorder %s76, %s77
      %p89 = scmp.eq.s32.totalorder %s25, 1
      %p90 = por %p88, %p89
      %p92 = scmp.ne.s32.totalorder %s77, %s91
      %p93 = scmp.eq.s32.totalorder %s25, 0
      %p94 = por %p92, %p93
      %s96 = sadd.s32 %s95, 1
      %p99 = scmp.eq.s32.totalorder %s19, 1
      %p100 = scmp.ne.s32.totalorder %s95, %s97
      %p101 = scmp.eq.s32.totalorder %s19, 0
      %p102 = por %p100, %p101
      %p103 = scmp.ne.s32.totalorder %s95, %s97
      %p104 = scmp.eq.s32.totalorder %s24, 1
      %p105 = por %p103, %p104
      %p106 = scmp.ne.s32.totalorder %s97, %s98
      %p107 = scmp.eq.s32.totalorder %s24, 0
      %p108 = por %p106, %p107
      %p109 = scmp.ne.s32.totalorder %s97, %s98
      %p110 = scmp.eq.s32.totalorder %s25, 1
      %p111 = por %p109, %p110
      %p113 = scmp.ne.s32.totalorder %s98, %s112
      %p114 = scmp.eq.s32.totalorder %s25, 0
      %p115 = por %p113, %p114
      %s117 = sadd.s32 %s116, 1
      %p120 = scmp.eq.s32.totalorder %s19, 1
      %p121 = scmp.ne.s32.totalorder %s116, %s118
      %p122 = scmp.eq.s32.totalorder %s19, 0
      %p123 = por %p121, %p122
      %p124 = scmp.ne.s32.totalorder %s116, %s118
      %p125 = scmp.eq.s32.totalorder %s24, 1
      %p126 = por %p124, %p125
      %p127 = scmp.ne.s32.totalorder %s118, %s119
      %p128 = scmp.eq.s32.totalorder %s24, 0
      %p129 = por %p127, %p128
      %p130 = scmp.ne.s32.totalorder %s118, %s119
      %p131 = scmp.eq.s32.totalorder %s25, 1
      %p132 = por %p130, %p131
      %p134 = scmp.ne.s32.totalorder %s119, %s133
      %p135 = scmp.eq.s32.totalorder %s25, 0
      %p136 = por %p134, %p135
      %s137 = ssub.s32 %s19, %s26
      %p138 = scmp.eq.s32.totalorder %s137, 0
      %s140 = sadd.s32 %s139, 1
      %s141 = scalar_select %p138, %s139, %s140
      %p144 = pneg %p138
      %p145 = scmp.eq.s32.totalorder %s19, 1
      %p146 = por %p144, %p145
      %p147 = scmp.ne.s32.totalorder %s139, %s142
      %p148 = scmp.eq.s32.totalorder %s19, 0
      %p149 = por %p147, %p148
      %p150 = scmp.ne.s32.totalorder %s139, %s142
      %p151 = scmp.eq.s32.totalorder %s24, 1
      %p152 = por %p150, %p151
      %p153 = scmp.ne.s32.totalorder %s142, %s143
      %p154 = scmp.eq.s32.totalorder %s24, 0
      %p155 = por %p153, %p154
      %p156 = scmp.ne.s32.totalorder %s142, %s143
      %p157 = scmp.eq.s32.totalorder %s25, 1
      %p158 = por %p156, %p157
      %p160 = scmp.ne.s32.totalorder %s143, %s159
      %p161 = scmp.eq.s32.totalorder %s25, 0
      %p162 = por %p160, %p161
      %p163 = scmp.le.s32.totalorder 1, %s19
      %p164 = scmp.lt.s32.totalorder %s19, 3
      %p165 = pnand %p163, %p164
      %p166 = pneg %p165
      // Predicated region
      $region9: #{mlp_forward.1} parent=5 // pred_check
        _
      $region10: #{mlp_forward.1} parent=5 // pred_check_branch
        %168 = sbr.rel (%p165) target = $region12
      $region11: #{mlp_forward.1} parent=5 // pred_region
        %s169 = ssub.s32 %s19, 1
        // Predicated region
        $region13: #{mlp_forward.1} parent=11 // pred_check
          %p170 = pneg %p66
        $region14: #{mlp_forward.1} parent=11 // pred_check_branch
          %172 = sbr.rel (%p170) target = $region16
        $region15: #{mlp_forward.1} parent=11 // pred_region
          %s174 = ssub.s32 4096, 4096
          %175 = vsyncadd [#allocation6], %s174
          %s176 = sshll.u32 [#allocation5], 4
          %s177 = int_to_ptr.vmem [resolvable:$true] %s176
          %182 = dma.hbm_to_vmem [thread:$0]  %s1, 4096, %s177, [#allocation6], 256, 256, 16
        $region16: #{mlp_forward.1} parent=11 // pred_fallthru
          _
        // Predicated region
        $region17: #{mlp_forward.1} parent=11 // pred_check
          %p183 = pneg %p87
        $region18: #{mlp_forward.1} parent=11 // pred_check_branch
          %185 = sbr.rel (%p183) target = $region20
        $region19: #{mlp_forward.1} parent=11 // pred_region
          %s187 = ssub.s32 64, 64
          %188 = vsyncadd [#allocation6], %s187
          %s190 = sshll.u32 [#allocation7], 4
          %s191 = int_to_ptr.vmem [resolvable:$true] %s190
          %193 = dma.hbm_to_vmem [thread:$0]  %s2, 64, %s191, [#allocation6]
        $region20: #{mlp_forward.1} parent=11 // pred_fallthru
          _
        // Predicated region
        $region21: #{mlp_forward.1} parent=11 // pred_check
          %p194 = pneg %p108
        $region22: #{mlp_forward.1} parent=11 // pred_check_branch
          %196 = sbr.rel (%p194) target = $region24
        $region23: #{mlp_forward.1} parent=11 // pred_region
          %s198 = ssub.s32 4096, 4096
          %199 = vsyncadd [#allocation9], %s198
          %s200 = sshll.u32 [#allocation8], 4
          %s201 = int_to_ptr.vmem [resolvable:$true] %s200
          %206 = dma.hbm_to_vmem [thread:$0]  %s3, 4096, %s201, [#allocation9], 64, 64, 4
        $region24: #{mlp_forward.1} parent=11 // pred_fallthru
          _
        // Predicated region
        $region25: #{mlp_forward.1} parent=11 // pred_check
          %p207 = pneg %p129
        $region26: #{mlp_forward.1} parent=11 // pred_check_branch
          %209 = sbr.rel (%p207) target = $region28
        $region27: #{mlp_forward.1} parent=11 // pred_region
          %s211 = ssub.s32 16, 16
          %212 = vsyncadd [#allocation9], %s211
          %s214 = sshll.u32 [#allocation10], 4
          %s215 = int_to_ptr.vmem [resolvable:$true] %s214
          %217 = dma.hbm_to_vmem [thread:$0]  %s4, 16, %s215, [#allocation9]
        $region28: #{mlp_forward.1} parent=11 // pred_fallthru
          _
      $region12: #{mlp_forward.1} parent=5 // pred_fallthru
        _
      %p218 = scmp.lt.s32.totalorder %s19, 2
      // Predicated region
      $region29: #{mlp_forward.1} parent=5 // pred_check
        %p219 = pneg %p218
      $region30: #{mlp_forward.1} parent=5 // pred_check_branch
        %221 = sbr.rel (%p219) target = $region32
      $region31: #{mlp_forward.1} parent=5 // pred_region
        // Predicated region
        $region33: #{mlp_forward.1} parent=31 // pred_check
          %p222 = pneg %p39
        $region34: #{mlp_forward.1} parent=31 // pred_check_branch
          %224 = sbr.rel (%p222) target = $region36
        $region35: #{mlp_forward.1} parent=31 // pred_region
          %s225 = sand.u32 %s29, 1
          %s226 = scalar_lea.sflag [#allocation3], %s225
          %s227 = sand.u32 %s29, 1
          %s228 = smul.addr %s227, 8
          %s229 = scalar_lea.vmem [#allocation2], %s228
          %s231 = ssub.s32 128, 128
          %232 = vsyncadd %s226, %s231
          %s233 = smul.addr %s19, 128
          %s234 = scalar_lea.hbm %s0, %s233
          %s236 = sshll.u32 %s229, 4
          %s237 = int_to_ptr.vmem [resolvable:$true] %s236
          %239 = dma.hbm_to_vmem [thread:$0]  %s234, 128, %s237, %s226
        $region36: #{mlp_forward.1} parent=31 // pred_fallthru
          _
      $region32: #{mlp_forward.1} parent=5 // pred_fallthru
        _
      %p240 = scmp.le.s32.totalorder 1, %s19
      %p241 = scmp.lt.s32.totalorder %s19, 3
      %p242 = pnand %p240, %p241
      %p243 = pneg %p242
      // Predicated region
      $region37: #{mlp_forward.1} parent=5 // pred_check
        _
      $region38: #{mlp_forward.1} parent=5 // pred_check_branch
        %245 = sbr.rel (%p242) target = $region40
      $region39: #{mlp_forward.1} parent=5 // pred_region
        %s246 = ssub.s32 %s19, 1
        %s247 = sand.u32 %s32, 1
        %s248 = scalar_lea.sflag [#allocation3], %s247
        %s249 = sand.u32 %s32, 1
        %s250 = smul.addr %s249, 8
        %s251 = scalar_lea.vmem [#allocation2], %s250
        // Predicated region
        $region41: #{mlp_forward.1} parent=39 // pred_check
          %p252 = pneg %p45
        $region42: #{mlp_forward.1} parent=39 // pred_check_branch
          %254 = sbr.rel (%p252) target = $region44
        $region43: #{mlp_forward.1} parent=39 // pred_region
          %255 = dma.done %s248, 128
        $region44: #{mlp_forward.1} parent=39 // pred_fallthru
          _
        // Predicated region
        $region45: #{mlp_forward.1} parent=39 // pred_check
          %p256 = pneg %p66
        $region46: #{mlp_forward.1} parent=39 // pred_check_branch
          %258 = sbr.rel (%p256) target = $region48
        $region47: #{mlp_forward.1} parent=39 // pred_region
          %259 = dma.done [#allocation6], 4096
        $region48: #{mlp_forward.1} parent=39 // pred_fallthru
          _
        // Predicated region
        $region49: #{mlp_forward.1} parent=39 // pred_check
          %p260 = pneg %p87
        $region50: #{mlp_forward.1} parent=39 // pred_check_branch
          %262 = sbr.rel (%p260) target = $region52
        $region51: #{mlp_forward.1} parent=39 // pred_region
          %263 = dma.done [#allocation6], 64
        $region52: #{mlp_forward.1} parent=39 // pred_fallthru
          _
        // Predicated region
        $region53: #{mlp_forward.1} parent=39 // pred_check
          %p264 = pneg %p108
        $region54: #{mlp_forward.1} parent=39 // pred_check_branch
          %266 = sbr.rel (%p264) target = $region56
        $region55: #{mlp_forward.1} parent=39 // pred_region
          %267 = dma.done [#allocation9], 4096
        $region56: #{mlp_forward.1} parent=39 // pred_fallthru
          _
        // Predicated region
        $region57: #{mlp_forward.1} parent=39 // pred_check
          %p268 = pneg %p129
        $region58: #{mlp_forward.1} parent=39 // pred_check_branch
          %270 = sbr.rel (%p268) target = $region60
        $region59: #{mlp_forward.1} parent=39 // pred_region
          %271 = dma.done [#allocation9], 16
        $region60: #{mlp_forward.1} parent=39 // pred_fallthru
          _
        %s272 = sand.u32 %s32, 1
        %s273 = scalar_lea.sflag [#allocation3], %s272
        %s274 = sand.u32 %s32, 1
        %s275 = smul.addr %s274, 8
        %s276 = scalar_lea.vmem [#allocation2], %s275
        %p277 = pneg %p45
        %p278 = pneg %p42
        %p279 = pneg %p66
        %p280 = pneg %p63
        %p281 = pneg %p87
        %p282 = pneg %p84
        %p283 = pneg %p108
        %p284 = pneg %p105
        %p285 = pneg %p129
        %p286 = pneg %p126
        %p287 = pneg %p155
        %p288 = pneg %p152
        %s289 = sand.u32 %s142, 1
        %s290 = scalar_lea.sflag [#allocation4], %s289
        %s291 = sand.u32 %s142, 1
        %s292 = smul.addr %s291, 8
        %s293 = scalar_lea.vmem [#allocation11], %s292
        %v295 = vld [vmem:[%s251] sm:$0xff]
        %v296 = vpack.c.bf16 %v295, %v295
        %v297 = vld [vmem:[#allocation5] sm:$0xff]
        %v298 = vld [vmem:[#allocation5 + $0x8] sm:$0xff]
        %v299 = vld [vmem:[#allocation5 + $0x10] sm:$0xff]
        %v300 = vld [vmem:[#allocation5 + $0x18] sm:$0xff]
        %v301 = vld [vmem:[#allocation5 + $0x20] sm:$0xff]
        %v302 = vld [vmem:[#allocation5 + $0x28] sm:$0xff]
        %v303 = vld [vmem:[#allocation5 + $0x30] sm:$0xff]
        %v304 = vld [vmem:[#allocation5 + $0x38] sm:$0xff]
        %v305 = vld [vmem:[#allocation5 + $0x40] sm:$0xff]
        %v306 = vld [vmem:[#allocation5 + $0x48] sm:$0xff]
        %v307 = vld [vmem:[#allocation5 + $0x50] sm:$0xff]
        %v308 = vld [vmem:[#allocation5 + $0x58] sm:$0xff]
        %v309 = vld [vmem:[#allocation5 + $0x60] sm:$0xff]
        %v310 = vld [vmem:[#allocation5 + $0x68] sm:$0xff]
        %v311 = vld [vmem:[#allocation5 + $0x70] sm:$0xff]
        %v312 = vld [vmem:[#allocation5 + $0x78] sm:$0xff]
        %v313 = vld [vmem:[#allocation5 + $0x80] sm:$0xff]
        %v314 = vld [vmem:[#allocation5 + $0x88] sm:$0xff]
        %v315 = vld [vmem:[#allocation5 + $0x90] sm:$0xff]
        %v316 = vld [vmem:[#allocation5 + $0x98] sm:$0xff]
        %v317 = vld [vmem:[#allocation5 + $0xa0] sm:$0xff]
        %v318 = vld [vmem:[#allocation5 + $0xa8] sm:$0xff]
        %v319 = vld [vmem:[#allocation5 + $0xb0] sm:$0xff]
        %v320 = vld [vmem:[#allocation5 + $0xb8] sm:$0xff]
        %v321 = vld [vmem:[#allocation5 + $0xc0] sm:$0xff]
        %v322 = vld [vmem:[#allocation5 + $0xc8] sm:$0xff]
        %v323 = vld [vmem:[#allocation5 + $0xd0] sm:$0xff]
        %v324 = vld [vmem:[#allocation5 + $0xd8] sm:$0xff]
        %v325 = vld [vmem:[#allocation5 + $0xe0] sm:$0xff]
        %v326 = vld [vmem:[#allocation5 + $0xe8] sm:$0xff]
        %v327 = vld [vmem:[#allocation5 + $0xf0] sm:$0xff]
        %v328 = vld [vmem:[#allocation5 + $0xf8] sm:$0xff]
        %v329 = vld [vmem:[#allocation7] sm:$0xf]
        %v331 = vlaneseq
        %v332 = vshrl.u32 %v331, 7
        %v333 = vsub.s32 0, %v332
        %v334 = vrot.slane %v329, %v333
        %v335 = vlaneseq
        %v336 = vshrl.u32 %v335, 7
        %v337 = vsub.s32 1, %v336
        %v338 = vrot.slane %v329, %v337
        %v339 = vlaneseq
        %v340 = vshrl.u32 %v339, 7
        %v341 = vsub.s32 2, %v340
        %v342 = vrot.slane %v329, %v341
        %v343 = vlaneseq
        %v344 = vshrl.u32 %v343, 7
        %v345 = vsub.s32 3, %v344
        %v346 = vrot.slane %v329, %v345
        %v383 = vunpack.c.l.b16 %v297
        %v384 = vunpack.c.h.b16 %v297
        %v385 = vunpack.c.l.b16 %v298
        %v386 = vunpack.c.h.b16 %v298
        %v387 = vunpack.c.l.b16 %v299
        %v388 = vunpack.c.h.b16 %v299
        %v389 = vunpack.c.l.b16 %v300
        %v390 = vunpack.c.h.b16 %v300
        %v391 = vunpack.c.l.b16 %v301
        %v392 = vunpack.c.h.b16 %v301
        %v393 = vunpack.c.l.b16 %v302
        %v394 = vunpack.c.h.b16 %v302
        %v395 = vunpack.c.l.b16 %v303
        %v396 = vunpack.c.h.b16 %v303
        %v397 = vunpack.c.l.b16 %v304
        %v398 = vunpack.c.h.b16 %v304
        %v399 = vunpack.c.l.b16 %v305
        %v400 = vunpack.c.h.b16 %v305
        %v401 = vunpack.c.l.b16 %v306
        %v402 = vunpack.c.h.b16 %v306
        %v403 = vunpack.c.l.b16 %v307
        %v404 = vunpack.c.h.b16 %v307
        %v405 = vunpack.c.l.b16 %v308
        %v406 = vunpack.c.h.b16 %v308
        %v407 = vunpack.c.l.b16 %v309
        %v408 = vunpack.c.h.b16 %v309
        %v409 = vunpack.c.l.b16 %v310
        %v410 = vunpack.c.h.b16 %v310
        %v411 = vunpack.c.l.b16 %v311
        %v412 = vunpack.c.h.b16 %v311
        %v413 = vunpack.c.l.b16 %v312
        %v414 = vunpack.c.h.b16 %v312
        %v415 = vunpack.c.l.b16 %v313
        %v416 = vunpack.c.h.b16 %v313
        %v417 = vunpack.c.l.b16 %v314
        %v418 = vunpack.c.h.b16 %v314
        %v419 = vunpack.c.l.b16 %v315
        %v420 = vunpack.c.h.b16 %v315
        %v421 = vunpack.c.l.b16 %v316
        %v422 = vunpack.c.h.b16 %v316
        %v423 = vunpack.c.l.b16 %v317
        %v424 = vunpack.c.h.b16 %v317
        %v425 = vunpack.c.l.b16 %v318
        %v426 = vunpack.c.h.b16 %v318
        %v427 = vunpack.c.l.b16 %v319
        %v428 = vunpack.c.h.b16 %v319
        %v429 = vunpack.c.l.b16 %v320
        %v430 = vunpack.c.h.b16 %v320
        %v431 = vunpack.c.l.b16 %v321
        %v432 = vunpack.c.h.b16 %v321
        %v433 = vunpack.c.l.b16 %v322
        %v434 = vunpack.c.h.b16 %v322
        %v435 = vunpack.c.l.b16 %v323
        %v436 = vunpack.c.h.b16 %v323
        %v437 = vunpack.c.l.b16 %v324
        %v438 = vunpack.c.h.b16 %v324
        %v439 = vunpack.c.l.b16 %v325
        %v440 = vunpack.c.h.b16 %v325
        %v441 = vunpack.c.l.b16 %v326
        %v442 = vunpack.c.h.b16 %v326
        %v443 = vunpack.c.l.b16 %v327
        %v444 = vunpack.c.h.b16 %v327
        %v445 = vunpack.c.l.b16 %v328
        %v446 = vunpack.c.h.b16 %v328
        %v447 = vpack.c.b16 %v387, %v383
        %v448 = vpack.c.b16 %v388, %v384
        %v449 = vpack.c.b16 %v389, %v385
        %v450 = vpack.c.b16 %v390, %v386
        %v451 = vpack.c.b16 %v395, %v391
        %v452 = vpack.c.b16 %v396, %v392
        %v453 = vpack.c.b16 %v397, %v393
        %v454 = vpack.c.b16 %v398, %v394
        %v455 = vpack.c.b16 %v403, %v399
        %v456 = vpack.c.b16 %v404, %v400
        %v457 = vpack.c.b16 %v405, %v401
        %v458 = vpack.c.b16 %v406, %v402
        %v459 = vpack.c.b16 %v411, %v407
        %v460 = vpack.c.b16 %v412, %v408
        %v461 = vpack.c.b16 %v413, %v409
        %v462 = vpack.c.b16 %v414, %v410
        %v463 = vpack.c.b16 %v419, %v415
        %v464 = vpack.c.b16 %v420, %v416
        %v465 = vpack.c.b16 %v421, %v417
        %v466 = vpack.c.b16 %v422, %v418
        %v467 = vpack.c.b16 %v427, %v423
        %v468 = vpack.c.b16 %v428, %v424
        %v469 = vpack.c.b16 %v429, %v425
        %v470 = vpack.c.b16 %v430, %v426
        %v471 = vpack.c.b16 %v435, %v431
        %v472 = vpack.c.b16 %v436, %v432
        %v473 = vpack.c.b16 %v437, %v433
        %v474 = vpack.c.b16 %v438, %v434
        %v475 = vpack.c.b16 %v443, %v439
        %v476 = vpack.c.b16 %v444, %v440
        %v477 = vpack.c.b16 %v445, %v441
        %v478 = vpack.c.b16 %v446, %v442
        %511 = vmatprep.subr.bf16.mxu0 %v448
        %512 = vmatpush1.bf16.msra.mxu0 %v447
        %513 = vmatprep.subr.bf16.mxu0 %v452
        %514 = vmatpush1.bf16.msra.mxu0 %v451
        %515 = vmatprep.subr.bf16.mxu0 %v456
        %516 = vmatpush1.bf16.msra.mxu0 %v455
        %517 = vmatprep.subr.bf16.mxu0 %v460
        %518 = vmatpush1.bf16.msra.mxu0 %v459
        %519 = vmatprep.subr.bf16.mxu0 %v464
        %520 = vmatpush1.bf16.msra.mxu0 %v463
        %521 = vmatprep.subr.bf16.mxu0 %v468
        %522 = vmatpush1.bf16.msra.mxu0 %v467
        %523 = vmatprep.subr.bf16.mxu0 %v472
        %524 = vmatpush1.bf16.msra.mxu0 %v471
        %525 = vmatprep.subr.bf16.mxu0 %v476
        %526 = vmatpush1.bf16.msra.mxu0 %v475
        %527 = vmatprep.subr.bf16.mxu0 0
        %528 = vmatpush1.bf16.msra.mxu0 0
        %529 = vmatprep.subr.bf16.mxu0 0
        %530 = vmatpush1.bf16.msra.mxu0 0
        %531 = vmatprep.subr.bf16.mxu0 0
        %532 = vmatpush1.bf16.msra.mxu0 0
        %533 = vmatprep.subr.bf16.mxu0 0
        %534 = vmatpush1.bf16.msra.mxu0 0
        %535 = vmatprep.subr.bf16.mxu0 0
        %536 = vmatpush1.bf16.msra.mxu0 0
        %537 = vmatprep.subr.bf16.mxu0 0
        %538 = vmatpush1.bf16.msra.mxu0 0
        %539 = vmatprep.subr.bf16.mxu0 0
        %540 = vmatpush1.bf16.msra.mxu0 0
        %541 = vmatprep.subr.bf16.mxu0 0
        %542 = vmatpush1.bf16.msra.mxu0 0
        %543 = vmatprep.mubr.bf16.mxu0 0
        %544 = vmatmul.mubr.bf16.gmra.mrb[0].mxu0 %v296
        %v545 = vpop.f32.mrb[0].mxu0
        %v546 = vadd.f32 %v334, %v545
        %v547 = vpop.f32.mrb[0].mxu0
        %v548 = vadd.f32 %v338, %v547
        %v549 = vpop.f32.mrb[0].mxu0
        %v550 = vpop.f32.mrb[0].mxu0
        %551 = vdwg.mxu0
        %552 = vmatprep.subr.bf16.mxu0 %v450
        %553 = vmatpush1.bf16.msra.mxu0 %v449
        %554 = vmatprep.subr.bf16.mxu0 %v454
        %555 = vmatpush1.bf16.msra.mxu0 %v453
        %556 = vmatprep.subr.bf16.mxu0 %v458
        %557 = vmatpush1.bf16.msra.mxu0 %v457
        %558 = vmatprep.subr.bf16.mxu0 %v462
        %559 = vmatpush1.bf16.msra.mxu0 %v461
        %560 = vmatprep.subr.bf16.mxu0 %v466
        %561 = vmatpush1.bf16.msra.mxu0 %v465
        %562 = vmatprep.subr.bf16.mxu0 %v470
        %563 = vmatpush1.bf16.msra.mxu0 %v469
        %564 = vmatprep.subr.bf16.mxu0 %v474
        %565 = vmatpush1.bf16.msra.mxu0 %v473
        %566 = vmatprep.subr.bf16.mxu0 %v478
        %567 = vmatpush1.bf16.msra.mxu0 %v477
        %568 = vmatprep.subr.bf16.mxu0 0
        %569 = vmatpush1.bf16.msra.mxu0 0
        %570 = vmatprep.subr.bf16.mxu0 0
        %571 = vmatpush1.bf16.msra.mxu0 0
        %572 = vmatprep.subr.bf16.mxu0 0
        %573 = vmatpush1.bf16.msra.mxu0 0
        %574 = vmatprep.subr.bf16.mxu0 0
        %575 = vmatpush1.bf16.msra.mxu0 0
        %576 = vmatprep.subr.bf16.mxu0 0
        %577 = vmatpush1.bf16.msra.mxu0 0
        %578 = vmatprep.subr.bf16.mxu0 0
        %579 = vmatpush1.bf16.msra.mxu0 0
        %580 = vmatprep.subr.bf16.mxu0 0
        %581 = vmatpush1.bf16.msra.mxu0 0
        %582 = vmatprep.subr.bf16.mxu0 0
        %583 = vmatpush1.bf16.msra.mxu0 0
        %584 = vmatprep.mubr.bf16.mxu0 0
        %585 = vmatmul.mubr.bf16.gmra.mrb[0].mxu0 %v296
        %v586 = vpop.f32.mrb[0].mxu0
        %v587 = vadd.f32 %v342, %v586
        %v588 = vpop.f32.mrb[0].mxu0
        %v589 = vadd.f32 %v346, %v588
        %v590 = vpop.f32.mrb[0].mxu0
        %v591 = vpop.f32.mrb[0].mxu0
        %592 = vdwg.mxu0
        %v593 = vmul.f32 %v546, 0.5
        %v594 = vmul.f32 %v548, 0.5
        %v595 = vmul.f32 %v587, 0.5
        %v596 = vmul.f32 %v589, 0.5
        %v597 = vmul.f32 %v546, 0.70710677
        %v598 = vmul.f32 %v548, 0.70710677
        %v599 = vmul.f32 %v587, 0.70710677
        %v600 = vmul.f32 %v589, 0.70710677
        %v601 = verf.f32.pop %v597
        %v602 = verf.f32.pop %v598
        %v603 = verf.f32.pop %v599
        %v604 = verf.f32.pop %v600
        %v605 = vadd.f32 %v601, 1.0
        %v606 = vadd.f32 %v602, 1.0
        %v607 = vadd.f32 %v603, 1.0
        %v608 = vadd.f32 %v604, 1.0
        %v609 = vmul.f32 %v593, %v605
        %v610 = vmul.f32 %v594, %v606
        %v611 = vmul.f32 %v595, %v607
        %v612 = vmul.f32 %v596, %v608
        %v613 = vpack.c.bf16 %v609, %v609
        %v614 = vpack.c.bf16 %v610, %v610
        %v615 = vpack.c.bf16 %v611, %v611
        %v616 = vpack.c.bf16 %v612, %v612
        %v617 = vld [vmem:[#allocation8] sm:$0xf]
        %v618 = vld [vmem:[#allocation8 + $0x4] sm:$0xf]
        %v619 = vld [vmem:[#allocation8 + $0x8] sm:$0xf]
        %v620 = vld [vmem:[#allocation8 + $0xc] sm:$0xf]
        %v621 = vld [vmem:[#allocation8 + $0x10] sm:$0xf]
        %v622 = vld [vmem:[#allocation8 + $0x14] sm:$0xf]
        %v623 = vld [vmem:[#allocation8 + $0x18] sm:$0xf]
        %v624 = vld [vmem:[#allocation8 + $0x1c] sm:$0xf]
        %v625 = vld [vmem:[#allocation8 + $0x20] sm:$0xf]
        %v626 = vld [vmem:[#allocation8 + $0x24] sm:$0xf]
        %v627 = vld [vmem:[#allocation8 + $0x28] sm:$0xf]
        %v628 = vld [vmem:[#allocation8 + $0x2c] sm:$0xf]
        %v629 = vld [vmem:[#allocation8 + $0x30] sm:$0xf]
        %v630 = vld [vmem:[#allocation8 + $0x34] sm:$0xf]
        %v631 = vld [vmem:[#allocation8 + $0x38] sm:$0xf]
        %v632 = vld [vmem:[#allocation8 + $0x3c] sm:$0xf]
        %v633 = vld [vmem:[#allocation8 + $0x40] sm:$0xf]
        %v634 = vld [vmem:[#allocation8 + $0x44] sm:$0xf]
        %v635 = vld [vmem:[#allocation8 + $0x48] sm:$0xf]
        %v636 = vld [vmem:[#allocation8 + $0x4c] sm:$0xf]
        %v637 = vld [vmem:[#allocation8 + $0x50] sm:$0xf]
        %v638 = vld [vmem:[#allocation8 + $0x54] sm:$0xf]
        %v639 = vld [vmem:[#allocation8 + $0x58] sm:$0xf]
        %v640 = vld [vmem:[#allocation8 + $0x5c] sm:$0xf]
        %v641 = vld [vmem:[#allocation8 + $0x60] sm:$0xf]
        %v642 = vld [vmem:[#allocation8 + $0x64] sm:$0xf]
        %v643 = vld [vmem:[#allocation8 + $0x68] sm:$0xf]
        %v644 = vld [vmem:[#allocation8 + $0x6c] sm:$0xf]
        %v645 = vld [vmem:[#allocation8 + $0x70] sm:$0xf]
        %v646 = vld [vmem:[#allocation8 + $0x74] sm:$0xf]
        %v647 = vld [vmem:[#allocation8 + $0x78] sm:$0xf]
        %v648 = vld [vmem:[#allocation8 + $0x7c] sm:$0xf]
        %v649 = vld [vmem:[#allocation8 + $0x80] sm:$0xf]
        %v650 = vld [vmem:[#allocation8 + $0x84] sm:$0xf]
        %v651 = vld [vmem:[#allocation8 + $0x88] sm:$0xf]
        %v652 = vld [vmem:[#allocation8 + $0x8c] sm:$0xf]
        %v653 = vld [vmem:[#allocation8 + $0x90] sm:$0xf]
        %v654 = vld [vmem:[#allocation8 + $0x94] sm:$0xf]
        %v655 = vld [vmem:[#allocation8 + $0x98] sm:$0xf]
        %v656 = vld [vmem:[#allocation8 + $0x9c] sm:$0xf]
        %v657 = vld [vmem:[#allocation8 + $0xa0] sm:$0xf]
        %v658 = vld [vmem:[#allocation8 + $0xa4] sm:$0xf]
        %v659 = vld [vmem:[#allocation8 + $0xa8] sm:$0xf]
        %v660 = vld [vmem:[#allocation8 + $0xac] sm:$0xf]
        %v661 = vld [vmem:[#allocation8 + $0xb0] sm:$0xf]
        %v662 = vld [vmem:[#allocation8 + $0xb4] sm:$0xf]
        %v663 = vld [vmem:[#allocation8 + $0xb8] sm:$0xf]
        %v664 = vld [vmem:[#allocation8 + $0xbc] sm:$0xf]
        %v665 = vld [vmem:[#allocation8 + $0xc0] sm:$0xf]
        %v666 = vld [vmem:[#allocation8 + $0xc4] sm:$0xf]
        %v667 = vld [vmem:[#allocation8 + $0xc8] sm:$0xf]
        %v668 = vld [vmem:[#allocation8 + $0xcc] sm:$0xf]
        %v669 = vld [vmem:[#allocation8 + $0xd0] sm:$0xf]
        %v670 = vld [vmem:[#allocation8 + $0xd4] sm:$0xf]
        %v671 = vld [vmem:[#allocation8 + $0xd8] sm:$0xf]
        %v672 = vld [vmem:[#allocation8 + $0xdc] sm:$0xf]
        %v673 = vld [vmem:[#allocation8 + $0xe0] sm:$0xf]
        %v674 = vld [vmem:[#allocation8 + $0xe4] sm:$0xf]
        %v675 = vld [vmem:[#allocation8 + $0xe8] sm:$0xf]
        %v676 = vld [vmem:[#allocation8 + $0xec] sm:$0xf]
        %v677 = vld [vmem:[#allocation8 + $0xf0] sm:$0xf]
        %v678 = vld [vmem:[#allocation8 + $0xf4] sm:$0xf]
        %v679 = vld [vmem:[#allocation8 + $0xf8] sm:$0xf]
        %v680 = vld [vmem:[#allocation8 + $0xfc] sm:$0xf]
        %v681 = vld [vmem:[#allocation10] sm:$0x1]
        %v683 = vlaneseq
        %v684 = vshrl.u32 %v683, 7
        %v685 = vsub.s32 0, %v684
        %v686 = vrot.slane %v681, %v685
        %v752 = vunpack.c.l.b16 %v617
        %v753 = vunpack.c.l.b16 %v618
        %v754 = vunpack.c.l.b16 %v619
        %v755 = vunpack.c.l.b16 %v620
        %v756 = vunpack.c.l.b16 %v621
        %v757 = vunpack.c.l.b16 %v622
        %v758 = vunpack.c.l.b16 %v623
        %v759 = vunpack.c.l.b16 %v624
        %v760 = vunpack.c.l.b16 %v625
        %v761 = vunpack.c.l.b16 %v626
        %v762 = vunpack.c.l.b16 %v627
        %v763 = vunpack.c.l.b16 %v628
        %v764 = vunpack.c.l.b16 %v629
        %v765 = vunpack.c.l.b16 %v630
        %v766 = vunpack.c.l.b16 %v631
        %v767 = vunpack.c.l.b16 %v632
        %v768 = vunpack.c.l.b16 %v633
        %v769 = vunpack.c.l.b16 %v634
        %v770 = vunpack.c.l.b16 %v635
        %v771 = vunpack.c.l.b16 %v636
        %v772 = vunpack.c.l.b16 %v637
        %v773 = vunpack.c.l.b16 %v638
        %v774 = vunpack.c.l.b16 %v639
        %v775 = vunpack.c.l.b16 %v640
        %v776 = vunpack.c.l.b16 %v641
        %v777 = vunpack.c.l.b16 %v642
        %v778 = vunpack.c.l.b16 %v643
        %v779 = vunpack.c.l.b16 %v644
        %v780 = vunpack.c.l.b16 %v645
        %v781 = vunpack.c.l.b16 %v646
        %v782 = vunpack.c.l.b16 %v647
        %v783 = vunpack.c.l.b16 %v648
        %v784 = vunpack.c.l.b16 %v649
        %v785 = vunpack.c.l.b16 %v650
        %v786 = vunpack.c.l.b16 %v651
        %v787 = vunpack.c.l.b16 %v652
        %v788 = vunpack.c.l.b16 %v653
        %v789 = vunpack.c.l.b16 %v654
        %v790 = vunpack.c.l.b16 %v655
        %v791 = vunpack.c.l.b16 %v656
        %v792 = vunpack.c.l.b16 %v657
        %v793 = vunpack.c.l.b16 %v658
        %v794 = vunpack.c.l.b16 %v659
        %v795 = vunpack.c.l.b16 %v660
        %v796 = vunpack.c.l.b16 %v661
        %v797 = vunpack.c.l.b16 %v662
        %v798 = vunpack.c.l.b16 %v663
        %v799 = vunpack.c.l.b16 %v664
        %v800 = vunpack.c.l.b16 %v665
        %v801 = vunpack.c.l.b16 %v666
        %v802 = vunpack.c.l.b16 %v667
        %v803 = vunpack.c.l.b16 %v668
        %v804 = vunpack.c.l.b16 %v669
        %v805 = vunpack.c.l.b16 %v670
        %v806 = vunpack.c.l.b16 %v671
        %v807 = vunpack.c.l.b16 %v672
        %v808 = vunpack.c.l.b16 %v673
        %v809 = vunpack.c.l.b16 %v674
        %v810 = vunpack.c.l.b16 %v675
        %v811 = vunpack.c.l.b16 %v676
        %v812 = vunpack.c.l.b16 %v677
        %v813 = vunpack.c.l.b16 %v678
        %v814 = vunpack.c.l.b16 %v679
        %v815 = vunpack.c.l.b16 %v680
        %v816 = vpack.c.b16 %v753, %v752
        %v817 = vpack.c.b16 %v755, %v754
        %v818 = vpack.c.b16 %v757, %v756
        %v819 = vpack.c.b16 %v759, %v758
        %v820 = vpack.c.b16 %v761, %v760
        %v821 = vpack.c.b16 %v763, %v762
        %v822 = vpack.c.b16 %v765, %v764
        %v823 = vpack.c.b16 %v767, %v766
        %v824 = vpack.c.b16 %v769, %v768
        %v825 = vpack.c.b16 %v771, %v770
        %v826 = vpack.c.b16 %v773, %v772
        %v827 = vpack.c.b16 %v775, %v774
        %v828 = vpack.c.b16 %v777, %v776
        %v829 = vpack.c.b16 %v779, %v778
        %v830 = vpack.c.b16 %v781, %v780
        %v831 = vpack.c.b16 %v783, %v782
        %v832 = vpack.c.b16 %v785, %v784
        %v833 = vpack.c.b16 %v787, %v786
        %v834 = vpack.c.b16 %v789, %v788
        %v835 = vpack.c.b16 %v791, %v790
        %v836 = vpack.c.b16 %v793, %v792
        %v837 = vpack.c.b16 %v795, %v794
        %v838 = vpack.c.b16 %v797, %v796
        %v839 = vpack.c.b16 %v799, %v798
        %v840 = vpack.c.b16 %v801, %v800
        %v841 = vpack.c.b16 %v803, %v802
        %v842 = vpack.c.b16 %v805, %v804
        %v843 = vpack.c.b16 %v807, %v806
        %v844 = vpack.c.b16 %v809, %v808
        %v845 = vpack.c.b16 %v811, %v810
        %v846 = vpack.c.b16 %v813, %v812
        %v847 = vpack.c.b16 %v815, %v814
        %880 = vmatprep.subr.bf16.mxu0 0
        %881 = vmatpush1.bf16.msra.mxu0 %v816
        %882 = vmatprep.subr.bf16.mxu0 0
        %883 = vmatpush1.bf16.msra.mxu0 %v817
        %884 = vmatprep.subr.bf16.mxu0 0
        %885 = vmatpush1.bf16.msra.mxu0 %v818
        %886 = vmatprep.subr.bf16.mxu0 0
        %887 = vmatpush1.bf16.msra.mxu0 %v819
        %888 = vmatprep.subr.bf16.mxu0 0
        %889 = vmatpush1.bf16.msra.mxu0 %v820
        %890 = vmatprep.subr.bf16.mxu0 0
        %891 = vmatpush1.bf16.msra.mxu0 %v821
        %892 = vmatprep.subr.bf16.mxu0 0
        %893 = vmatpush1.bf16.msra.mxu0 %v822
        %894 = vmatprep.subr.bf16.mxu0 0
        %895 = vmatpush1.bf16.msra.mxu0 %v823
        %896 = vmatprep.subr.bf16.mxu0 0
        %897 = vmatpush1.bf16.msra.mxu0 %v824
        %898 = vmatprep.subr.bf16.mxu0 0
        %899 = vmatpush1.bf16.msra.mxu0 %v825
        %900 = vmatprep.subr.bf16.mxu0 0
        %901 = vmatpush1.bf16.msra.mxu0 %v826
        %902 = vmatprep.subr.bf16.mxu0 0
        %903 = vmatpush1.bf16.msra.mxu0 %v827
        %904 = vmatprep.subr.bf16.mxu0 0
        %905 = vmatpush1.bf16.msra.mxu0 %v828
        %906 = vmatprep.subr.bf16.mxu0 0
        %907 = vmatpush1.bf16.msra.mxu0 %v829
        %908 = vmatprep.subr.bf16.mxu0 0
        %909 = vmatpush1.bf16.msra.mxu0 %v830
        %910 = vmatprep.subr.bf16.mxu0 0
        %911 = vmatpush1.bf16.msra.mxu0 %v831
        %912 = vmatprep.mubr.bf16.mxu0 %v614
        %913 = vmatmul.mubr.bf16.gmra.mrb[0].mxu0 %v613
        %v914 = vpop.f32.mrb[0].mxu0
        %v915 = vadd.f32 %v686, %v914
        %v916 = vpop.f32.mrb[0].mxu0
        %v917 = vpop.f32.mrb[0].mxu0
        %v918 = vpop.f32.mrb[0].mxu0
        %919 = vdwg.mxu0
        %920 = vmatprep.subr.bf16.mxu0 0
        %921 = vmatpush1.bf16.msra.mxu0 %v832
        %922 = vmatprep.subr.bf16.mxu0 0
        %923 = vmatpush1.bf16.msra.mxu0 %v833
        %924 = vmatprep.subr.bf16.mxu0 0
        %925 = vmatpush1.bf16.msra.mxu0 %v834
        %926 = vmatprep.subr.bf16.mxu0 0
        %927 = vmatpush1.bf16.msra.mxu0 %v835
        %928 = vmatprep.subr.bf16.mxu0 0
        %929 = vmatpush1.bf16.msra.mxu0 %v836
        %930 = vmatprep.subr.bf16.mxu0 0
        %931 = vmatpush1.bf16.msra.mxu0 %v837
        %932 = vmatprep.subr.bf16.mxu0 0
        %933 = vmatpush1.bf16.msra.mxu0 %v838
        %934 = vmatprep.subr.bf16.mxu0 0
        %935 = vmatpush1.bf16.msra.mxu0 %v839
        %936 = vmatprep.subr.bf16.mxu0 0
        %937 = vmatpush1.bf16.msra.mxu0 %v840
        %938 = vmatprep.subr.bf16.mxu0 0
        %939 = vmatpush1.bf16.msra.mxu0 %v841
        %940 = vmatprep.subr.bf16.mxu0 0
        %941 = vmatpush1.bf16.msra.mxu0 %v842
        %942 = vmatprep.subr.bf16.mxu0 0
        %943 = vmatpush1.bf16.msra.mxu0 %v843
        %944 = vmatprep.subr.bf16.mxu0 0
        %945 = vmatpush1.bf16.msra.mxu0 %v844
        %946 = vmatprep.subr.bf16.mxu0 0
        %947 = vmatpush1.bf16.msra.mxu0 %v845
        %948 = vmatprep.subr.bf16.mxu0 0
        %949 = vmatpush1.bf16.msra.mxu0 %v846
        %950 = vmatprep.subr.bf16.mxu0 0
        %951 = vmatpush1.bf16.msra.mxu0 %v847
        %952 = vmatprep.mubr.bf16.mxu0 %v616
        %953 = vmatmul.mubr.bf16.gmra.mrb[0].mxu0 %v615
        %v954 = vpop.f32.mrb[0].mxu0
        %v955 = vadd.f32 %v915, %v954
        %v956 = vpop.f32.mrb[0].mxu0
        %v957 = vpop.f32.mrb[0].mxu0
        %v958 = vpop.f32.mrb[0].mxu0
        %959 = vdwg.mxu0
        %960 = vst [vmem:[%s293] sm:$0xff] %v955
        %s961 = sand.u32 %s142, 1
        %s962 = scalar_lea.sflag [#allocation4], %s961
        %s963 = sand.u32 %s142, 1
        %s964 = smul.addr %s963, 8
        %s965 = scalar_lea.vmem [#allocation11], %s964
        // Predicated region
        $region61: #{mlp_forward.1} parent=39 // pred_check
          %p966 = pneg %p152
        $region62: #{mlp_forward.1} parent=39 // pred_check_branch
          %968 = sbr.rel (%p966) target = $region64
        $region63: #{mlp_forward.1} parent=39 // pred_region
          %s970 = ssub.s32 128, 128
          %971 = vsyncadd %s962, %s970
          %s972 = smul.addr %s24, 128
          %s973 = scalar_lea.hbm %s5, %s972
          %s975 = sshll.u32 %s965, 4
          %s976 = int_to_ptr.vmem [resolvable:$true] %s975
          %978 = dma.vmem_to_hbm [thread:$0]  %s976, 128, %s973, %s962
        $region64: #{mlp_forward.1} parent=39 // pred_fallthru
          _
      $region40: #{mlp_forward.1} parent=5 // pred_fallthru
        _
      %p979 = scmp.le.s32.totalorder 2, %s19
      // Predicated region
      $region65: #{mlp_forward.1} parent=5 // pred_check
        %p980 = pneg %p979
      $region66: #{mlp_forward.1} parent=5 // pred_check_branch
        %982 = sbr.rel (%p980) target = $region68
      $region67: #{mlp_forward.1} parent=5 // pred_region
        %s983 = ssub.s32 %s19, 2
        // Predicated region
        $region69: #{mlp_forward.1} parent=67 // pred_check
          %p984 = pneg %p158
        $region70: #{mlp_forward.1} parent=67 // pred_check_branch
          %986 = sbr.rel (%p984) target = $region72
        $region71: #{mlp_forward.1} parent=67 // pred_region
          %s987 = sand.u32 %s143, 1
          %s988 = scalar_lea.sflag [#allocation4], %s987
          %s989 = sand.u32 %s143, 1
          %s990 = smul.addr %s989, 8
          %s991 = scalar_lea.vmem [#allocation11], %s990
          %992 = dma.done %s988, 128
        $region72: #{mlp_forward.1} parent=67 // pred_fallthru
          _
      $region68: #{mlp_forward.1} parent=5 // pred_fallthru
        _
    $region6: #{mlp_forward.1} parent=1 // loop_footer
      %s23 = sadd.s32 1, %s19
    $region7: #{mlp_forward.1} parent=1 // loop_footer_branch
      %18 = sbr.rel target = $region3
    $region8: #{mlp_forward.1} parent=1 // loop_exit
      _
    %993 = vsyncpa [#allocation3], 1
    %s994 = scalar_lea.sflag [#allocation3], 1
    %995 = vsyncpa %s994, 1
    %996 = vsyncpa [#allocation6], 1
    %997 = vsyncpa [#allocation9], 1
    %998 = vsyncpa [#allocation4], 1
    %s999 = scalar_lea.sflag [#allocation4], 1
    %1000 = vsyncpa %s999, 1

</llo_original>
